<compile_context>
chip_gen: v7x
topology: tpu7x:2x2x1
jax: 0.10.0
libtpu: 0.0.40
codegen_flags: <defaults>
</compile_context>

<pallas_src>
import jax
import jax.numpy as jnp
from jax.experimental import pallas as pl
from jax.experimental.pallas import tpu as pltpu

_LANES = 512        # lane-dense last dim (multiple of 128)
_MAX_TILE_ROWS = 512  # rows per block (multiple of 8), ~1 MiB f32 per buffer


def _elementwise_kernel(x_ref, o_ref):
    # ((x + 2) * 3) / 2  folded to a single fused multiply-add.
    o_ref[...] = x_ref[...] * 1.5 + 3.0


def pt_module_forward(x):
    """Pallas implementation of PtModule.forward.

    x: any float array (e.g. NCHW). Returns same shape/dtype.
    """
    orig_shape = x.shape
    orig_dtype = x.dtype
    total = x.size

    # Lane-dense slab: (rows_padded, _LANES)
    rows = -(-total // _LANES)
    if rows <= _MAX_TILE_ROWS:
        tile_rows = rows                  # block == full row extent (OK per tiling rule)
        rows_padded = rows
    else:
        tile_rows = _MAX_TILE_ROWS        # multiple of 8
        rows_padded = -(-rows // tile_rows) * tile_rows

    padded_total = rows_padded * _LANES
    flat = x.reshape(-1)
    if padded_total != total:
        flat = jnp.pad(flat, (0, padded_total - total))
    x2d = flat.reshape(rows_padded, _LANES)

    grid = (rows_padded // tile_rows,)

    out2d = pl.pallas_call(
        _elementwise_kernel,
        out_shape=jax.ShapeDtypeStruct(x2d.shape, orig_dtype),
        grid=grid,
        in_specs=[pl.BlockSpec((tile_rows, _LANES), lambda i: (i, 0))],
        out_specs=pl.BlockSpec((tile_rows, _LANES), lambda i: (i, 0)),
        input_output_aliases={0: 0},  # donate the intermediate input slab
        compiler_params=pltpu.CompilerParams(
            dimension_semantics=("parallel",),  # independent rows -> megacore on v7x
        ),
    )(x2d)

    return out2d.reshape(-1)[:total].reshape(orig_shape)


if __name__ == "__main__":
    key = jax.random.PRNGKey(0)
    # Small NCHW input consistent with the module's generic elementwise forward.
    x = jax.random.normal(key, (2, 4, 16, 16), dtype=jnp.float32)

    out = pt_module_forward(x)
    out = jax.block_until_ready(out)

    # Reference check (pure JAX) — same math as the PyTorch module.
    ref = ((x + 2.0) * 3.0) / 2.0
    assert out.shape == x.shape
    assert out.dtype == x.dtype
    assert jnp.allclose(out, ref, atol=1e-6), "mismatch vs reference"

    print("KERNEL_OK")
</pallas_src>

<mosaic_0001>
module attributes {stable_mosaic.version = 11 : i64} {
  func.func @_elementwise_kernel(%arg0: i32, %arg1: memref<4x512xf32, #tpu.memory_space<vmem>>, %arg2: memref<4x512xf32, #tpu.memory_space<vmem>>) attributes {dimension_semantics = [#tpu.dimension_semantics<parallel>], iteration_bounds = array<i64: 1>, scalar_prefetch = 0 : i64, scratch_operands = 0 : i64, tpu.core_type = #tpu.core_type<tc>, window_params = [{transform_indices = @transform_0, window_bounds = array<i64: 4, 512>}, {transform_indices = @transform_1, window_bounds = array<i64: 4, 512>}]} {
    %c0 = arith.constant 0 : index
    %c0_0 = arith.constant 0 : index
    %0 = vector.load %arg1[%c0, %c0_0] : memref<4x512xf32, #tpu.memory_space<vmem>>, vector<4x512xf32>
    %cst = arith.constant 1.500000e+00 : f32
    %1 = vector.broadcast %cst : f32 to vector<4x512xf32>
    %2 = arith.mulf %0, %1 : vector<4x512xf32>
    %cst_1 = arith.constant 3.000000e+00 : f32
    %3 = vector.broadcast %cst_1 : f32 to vector<4x512xf32>
    %4 = arith.addf %2, %3 : vector<4x512xf32>
    %c0_2 = arith.constant 0 : index
    %c0_3 = arith.constant 0 : index
    %5 = vector.load %arg2[%c0_2, %c0_3] : memref<4x512xf32, #tpu.memory_space<vmem>>, vector<4x512xf32>
    tpu.vector_store %arg2[%c0_2, %c0_3], %4 {strides = array<i32>} : memref<4x512xf32, #tpu.memory_space<vmem>>, vector<4x512xf32>,
    return
  }
  func.func @transform_0(%arg0: i32) -> (i32, i32) {
    %c0_i32 = arith.constant 0 : i32
    %c0_i32_0 = arith.constant 0 : i32
    return %arg0, %c0_i32 : i32, i32
  }
  func.func @transform_1(%arg0: i32) -> (i32, i32) {
    %c0_i32 = arith.constant 0 : i32
    %c0_i32_0 = arith.constant 0 : i32
    return %arg0, %c0_i32 : i32, i32
  }
}

</mosaic_0001>

<llo_original>
// kernel: tpu_custom_call.1
$region0: #{tpu_custom_call.1}
  #allocation0 [shape = 'u32[]', space=smem, size = 0x4, offset = 0x4, fixed_abs, tag = 'smem constant byte address 0x4 - core index']
  #allocation1 [shape = 'u32[144,128]{1,0:T(1,128)}', space=vmem, size = 0x12000, scoped, tag = 'internal scratch']
  %s0 = inlined_call_operand.hbm [shape: f32[4,512], index: 0, kind: input, shape index: {}, may-alias: {0,1}]
  %s1 = inlined_call_operand.hbm [shape: f32[4,512], index: 1, kind: output, shape index: {}, may-alias: {0,1}]
  %s2 = sld [smem:[#allocation0]]
  $region18: #{tpu_custom_call.1} parent=0
    _
  %s4 = ssub.s32 1, %s2
  %s5 = scalar_select 0, %s4, %s2
  $region1: #{tpu_custom_call.1} parent=0
    #allocation2 [shape = 'u8[8192]{0}', space=vmem, size = 0x2000, scoped, tag = 'input window, operand 0, single buffered']
    #allocation3 [shape = 's32[1]{0}', space=sflag, size = 0x4, scoped, tag = 'scoped memory for tpu_custom_call.1']
    #allocation4 [shape = 's32[1]{0}', space=sflag, size = 0x4, scoped, tag = 'scoped memory for tpu_custom_call.1']
    #allocation5 [shape = 'u8[8192]{0}', space=vmem, size = 0x2000, scoped, tag = 'output window, operand 0, single buffered']
    %6 = vsyncpa [#allocation3], 0
    %7 = vsyncpa [#allocation4], 0
    // Predicated region
    $region2: #{tpu_custom_call.1} parent=1 // pred_check
      _
    $region3: #{tpu_custom_call.1} parent=1 // pred_check_branch
      %9 = sbr.rel (0) target = $region5
    $region4: #{tpu_custom_call.1} parent=1 // pred_region
      %s11 = ssub.s32 256, 256
      %12 = vsyncadd [#allocation3], %s11
      %s14 = sshll.u32 [#allocation2], 4
      %s15 = int_to_ptr.vmem [resolvable:$true] %s14
      %17 = dma.hbm_to_vmem [thread:$0]  %s0, 256, %s15, [#allocation3]
    $region5: #{tpu_custom_call.1} parent=1 // pred_fallthru
      _
    // Predicated region
    $region6: #{tpu_custom_call.1} parent=1 // pred_check
      _
    $region7: #{tpu_custom_call.1} parent=1 // pred_check_branch
      %19 = sbr.rel (0) target = $region9
    $region8: #{tpu_custom_call.1} parent=1 // pred_region
      %20 = dma.done [#allocation3], 256
    $region9: #{tpu_custom_call.1} parent=1 // pred_fallthru
      _
    %v21 = vld [vmem:[#allocation2] sm:$0xff]
    %v22 = vld [vmem:[#allocation2 + $0x8] sm:$0xff]
    %v23 = vmul.f32 %v21, 1.5
    %v24 = vmul.f32 %v22, 1.5
    %v25 = vadd.f32 %v23, 3.0
    %v26 = vadd.f32 %v24, 3.0
    %27 = vst [vmem:[#allocation5] sm:$0xff] %v25
    %28 = vst [vmem:[#allocation5 + $0x8] sm:$0xff] %v26
    // Predicated region
    $region10: #{tpu_custom_call.1} parent=1 // pred_check
      _
    $region11: #{tpu_custom_call.1} parent=1 // pred_check_branch
      %30 = sbr.rel (0) target = $region13
    $region12: #{tpu_custom_call.1} parent=1 // pred_region
      %s32 = ssub.s32 256, 256
      %33 = vsyncadd [#allocation4], %s32
      %s35 = sshll.u32 [#allocation5], 4
      %s36 = int_to_ptr.vmem [resolvable:$true] %s35
      %38 = dma.vmem_to_hbm [thread:$0]  %s36, 256, %s1, [#allocation4]
    $region13: #{tpu_custom_call.1} parent=1 // pred_fallthru
      _
    // Predicated region
    $region14: #{tpu_custom_call.1} parent=1 // pred_check
      _
    $region15: #{tpu_custom_call.1} parent=1 // pred_check_branch
      %40 = sbr.rel (0) target = $region17
    $region16: #{tpu_custom_call.1} parent=1 // pred_region
      %41 = dma.done [#allocation4], 256
    $region17: #{tpu_custom_call.1} parent=1 // pred_fallthru
      _
    %42 = vsyncpa [#allocation3], 1
    %43 = vsyncpa [#allocation4], 1

</llo_original>
